<compile_context>
chip_gen: v5e
topology: v5e:2x2
jax: 0.10.0
libtpu: 0.0.40
codegen_flags: <defaults>
</compile_context>

<pallas_src>
import functools
import math

import jax
import jax.numpy as jnp
from jax.experimental import pallas as pl
from jax.experimental.pallas import tpu as pltpu


def _round_up(x, m):
    return ((x + m - 1) // m) * m


def _net2_kernel(d2_pad, f_pad,
                 ahat_ref, xw_ref, w1_ref, w2_ref, bias_ref, out_ref, acc_ref):
    k = pl.program_id(1)
    dot = functools.partial(jnp.dot, preferred_element_type=jnp.float32)

    @pl.when(k == 0)
    def _init():
        acc_ref[...] = jnp.zeros_like(acc_ref)

    # Accumulate Ahat[row_tile, k_tile] @ (x @ Wg)[k_tile, :] in f32.
    acc_ref[...] += dot(ahat_ref[...], xw_ref[...])

    @pl.when(k == pl.num_programs(1) - 1)
    def _epilogue():
        # Packed bias slab (lane-aligned slices, stay views):
        #   row 0 = GCN bias [d1_pad], row 1 = fc1 bias [d2_pad], row 2 = fc2 bias [f_pad].
        bg = bias_ref[0:1, :]
        b1 = bias_ref[1:2, :d2_pad]
        b2 = bias_ref[2:3, :f_pad]

        h = jnp.maximum(acc_ref[...] + bg, 0.0)            # GCNConv bias + ReLU
        # F.dropout(x, training=False) is the identity at inference.
        # TODO(synk): training-mode dropout (p=0.5) would need pltpu.prng_* masking.
        h = jnp.maximum(dot(h, w1_ref[...]) + b1, 0.0)     # relu(fc1)
        out_ref[...] = (dot(h, w2_ref[...]) + b2).astype(out_ref.dtype)   # fc2


def _gcn_norm_adj(edge_index, n):
    """Dense D^-1/2 (A + I) D^-1/2 matching torch_geometric's gcn_norm (add self loops).

    Note: existing self-loops are replaced by fill_value=1 (add_remaining_self_loops
    semantics); duplicate edges accumulate.
    """
    row = edge_index[0].astype(jnp.int32)
    col = edge_index[1].astype(jnp.int32)
    w_edge = (row != col).astype(jnp.float32)
    loop = jnp.arange(n, dtype=jnp.int32)
    rows = jnp.concatenate([row, loop])
    cols = jnp.concatenate([col, loop])
    wts = jnp.concatenate([w_edge, jnp.ones((n,), jnp.float32)])
    deg = jnp.zeros((n,), jnp.float32).at[cols].add(wts)
    dinv = jnp.where(deg > 0, jax.lax.rsqrt(deg), 0.0)
    norm = dinv[rows] * wts * dinv[cols]
    # out[i] = sum over edges (j -> i) of norm * h[j]  =>  Ahat[i, j] += norm
    return jnp.zeros((n, n), jnp.float32).at[cols, rows].add(norm)


def net2_forward(x, edge_index, params, *, ahat_dtype=jnp.bfloat16,
                 tile_rows=None, tile_cols=None):
    x = x.astype(jnp.float32)
    n = x.shape[0]
    w_gcn = params["w_gcn"].astype(jnp.float32)
    b_gcn = params["b_gcn"].astype(jnp.float32)
    w1 = params["w1"].astype(jnp.float32)
    b1 = params["b1"].astype(jnp.float32)
    w2 = params["w2"].astype(jnp.float32)
    b2 = params["b2"].astype(jnp.float32)
    d1, d2, f_out = w_gcn.shape[1], w1.shape[1], w2.shape[1]

    # Lane-dense padded hidden/output dims (300->384, 100->128, 1->128).
    d1_pad = _round_up(d1, 128)
    d2_pad = _round_up(d2, 128)
    f_pad = _round_up(f_out, 128)

    # ---- glue: data-dependent scatter + tiny feature matmul stay in JAX ---------
    ahat = _gcn_norm_adj(edge_index, n)
    xw = x @ w_gcn                                        # (n, d1), lane-dense operand

    # ---- tile selection ----------------------------------------------------------
    if tile_rows is None or tile_cols is None:
        if n <= 512:
            # Small graph: single grid step, no pipeline bookkeeping.
            tn = tk = _round_up(max(n, 8), 8)
        else:
            # Roofline-friendly tiles; double-buffered blocks stay ~2 MiB (v7x safe).
            tn, tk = 256, 512
    else:
        tn, tk = int(tile_rows), int(tile_cols)
    n_pad = _round_up(n, math.lcm(tn, tk))

    # ---- pad operands --------------------------------------------------------------
    ahat_p = jnp.zeros((n_pad, n_pad), ahat_dtype).at[:n, :n].set(ahat.astype(ahat_dtype))
    xw_p = jnp.zeros((n_pad, d1_pad), jnp.float32).at[:n, :d1].set(xw)
    w1_p = jnp.zeros((d1_pad, d2_pad), jnp.float32).at[:d1, :d2].set(w1)
    w2_p = jnp.zeros((d2_pad, f_pad), jnp.float32).at[:d2, :f_out].set(w2)
    bias_slab = jnp.zeros((3, d1_pad), jnp.float32)
    bias_slab = bias_slab.at[0, :d1].set(b_gcn)
    bias_slab = bias_slab.at[1, :d2].set(b1)
    bias_slab = bias_slab.at[2, :f_out].set(b2)

    grid = (n_pad // tn, n_pad // tk)
    kernel = functools.partial(_net2_kernel, d2_pad, f_pad)

    flops = 2 * n_pad * (n_pad * d1_pad + d1_pad * d2_pad + d2_pad * f_pad)
    bytes_accessed = (n_pad * n_pad * jnp.dtype(ahat_dtype).itemsize
                      + 4 * (n_pad * d1_pad + d1_pad * d2_pad + d2_pad * f_pad
                             + 3 * d1_pad + n_pad * f_pad))

    out = pl.pallas_call(
        kernel,
        out_shape=jax.ShapeDtypeStruct((n_pad, f_pad), jnp.float32),
        grid_spec=pltpu.PrefetchScalarGridSpec(
            num_scalar_prefetch=0,
            grid=grid,
            in_specs=[
                pl.BlockSpec((tn, tk), lambda i, k: (i, k)),        # Ahat block (streamed)
                pl.BlockSpec((tk, d1_pad), lambda i, k: (k, 0)),    # x @ Wg block (streamed over k)
                pl.BlockSpec((d1_pad, d2_pad), lambda i, k: (0, 0)),  # fc1 weight (resident)
                pl.BlockSpec((d2_pad, f_pad), lambda i, k: (0, 0)),   # fc2 weight (resident)
                pl.BlockSpec((3, d1_pad), lambda i, k: (0, 0)),       # packed biases (resident)
            ],
            out_specs=pl.BlockSpec((tn, f_pad), lambda i, k: (i, 0)),
            scratch_shapes=[pltpu.VMEM((tn, d1_pad), jnp.float32)],   # GCN accumulator
        ),
        compiler_params=pltpu.CompilerParams(
            dimension_semantics=("parallel", "arbitrary"),
            # K-tiled blocks keep the footprint far below this on every generation
            # (including v7x's 64 MiB physical VMEM).
            vmem_limit_bytes=32 * 1024 * 1024,
        ),
        cost_estimate=pl.CostEstimate(flops=int(flops), transcendentals=0,
                                      bytes_accessed=int(bytes_accessed)),
    )(ahat_p, xw_p, w1_p, w2_p, bias_slab)
    return out[:n, :f_out]


def _net2_reference(x, edge_index, params):
    ahat = _gcn_norm_adj(edge_index, x.shape[0])
    h = ahat @ (x @ params["w_gcn"]) + params["b_gcn"]
    h = jnp.maximum(h, 0.0)
    h = jnp.maximum(h @ params["w1"] + params["b1"], 0.0)
    return h @ params["w2"] + params["b2"]


def init_params(key, num_features, d1, d2):
    keys = jax.random.split(key, 3)

    def lin(k, din, dout):
        kw, kb = jax.random.split(k)
        bound = 1.0 / jnp.sqrt(float(din))
        w = jax.random.uniform(kw, (din, dout), jnp.float32, -bound, bound)
        b = jax.random.uniform(kb, (dout,), jnp.float32, -bound, bound)
        return w, b

    p = {}
    p["w_gcn"], p["b_gcn"] = lin(keys[0], num_features, d1)   # GCNConv lin + bias
    p["w1"], p["b1"] = lin(keys[1], d1, d2)                   # fc1
    p["w2"], p["b2"] = lin(keys[2], d2, num_features)         # fc2
    return p


if __name__ == "__main__":
    key = jax.random.PRNGKey(0)
    kp, kx, ke, kx2, ke2 = jax.random.split(key, 5)

    NUM_FEATURES, D1, D2 = 1, 300, 100     # Net2 defaults: num_features=1, d1=300, d2=100

    # --- Test 1: small graph, f32 Ahat, single grid step ------------------------
    N, E = 16, 40
    params = init_params(kp, NUM_FEATURES, D1, D2)
    x = jax.random.normal(kx, (N, NUM_FEATURES), jnp.float32)
    edge_index = jax.random.randint(ke, (2, E), 0, N, dtype=jnp.int32)

    out = net2_forward(x, edge_index, params, ahat_dtype=jnp.float32)
    jax.block_until_ready(out)
    ref = _net2_reference(x, edge_index, params)
    assert out.shape == (N, NUM_FEATURES)
    assert bool(jnp.all(jnp.isfinite(out)))
    assert bool(jnp.allclose(out, ref, rtol=1e-3, atol=1e-3))

    # --- Test 2: larger graph, bf16 Ahat, forced K-tiled grid (3 x 3 steps) -----
    N2, E2 = 300, 900
    x2 = jax.random.normal(kx2, (N2, NUM_FEATURES), jnp.float32)
    edge_index2 = jax.random.randint(ke2, (2, E2), 0, N2, dtype=jnp.int32)

    out2 = net2_forward(x2, edge_index2, params, ahat_dtype=jnp.bfloat16,
                        tile_rows=128, tile_cols=128)
    jax.block_until_ready(out2)
    ref2 = _net2_reference(x2, edge_index2, params)
    assert out2.shape == (N2, NUM_FEATURES)
    assert bool(jnp.all(jnp.isfinite(out2)))
    assert bool(jnp.allclose(out2, ref2, rtol=2e-2, atol=2e-2))   # bf16 Ahat tolerance

    print("KERNEL_OK")
</pallas_src>

<mosaic_0001>
module attributes {stable_mosaic.version = 11 : i64} {
  func.func @_net2_kernel(%arg0: i32, %arg1: i32, %arg2: memref<16x16xf32, #tpu.memory_space<vmem>>, %arg3: memref<16x384xf32, #tpu.memory_space<vmem>>, %arg4: memref<384x128xf32, #tpu.memory_space<vmem>>, %arg5: memref<128x128xf32, #tpu.memory_space<vmem>>, %arg6: memref<3x384xf32, #tpu.memory_space<vmem>>, %arg7: memref<16x128xf32, #tpu.memory_space<vmem>>, %arg8: memref<16x384xf32, #tpu.memory_space<vmem>>) attributes {dimension_semantics = [#tpu.dimension_semantics<parallel>, #tpu.dimension_semantics<arbitrary>], iteration_bounds = array<i64: 1, 1>, scalar_prefetch = 0 : i64, scratch_operands = 1 : i64, tpu.core_type = #tpu.core_type<tc>, window_params = [{transform_indices = @transform_0, window_bounds = array<i64: 16, 16>}, {transform_indices = @transform_1, window_bounds = array<i64: 16, 384>}, {pipeline_mode = #tpu.pipeline_mode<synchronous>, transform_indices = @transform_2, window_bounds = array<i64: 384, 128>}, {pipeline_mode = #tpu.pipeline_mode<synchronous>, transform_indices = @transform_3, window_bounds = array<i64: 128, 128>}, {pipeline_mode = #tpu.pipeline_mode<synchronous>, transform_indices = @transform_4, window_bounds = array<i64: 3, 384>}, {transform_indices = @transform_5, window_bounds = array<i64: 16, 128>}]} {
    %c0_i32 = arith.constant 0 : i32
    %0 = arith.cmpi eq, %arg1, %c0_i32 : i32
    %1 = arith.extui %0 : i1 to i32
    %c0_i32_0 = arith.constant 0 : i32
    %2 = arith.cmpi ne, %1, %c0_i32_0 : i32
    scf.if %2 {
      %cst_10 = arith.constant 0.000000e+00 : f32
      %12 = vector.broadcast %cst_10 : f32 to vector<16x384xf32>
      %c0_11 = arith.constant 0 : index
      %c0_12 = arith.constant 0 : index
      %13 = vector.load %arg8[%c0_11, %c0_12] : memref<16x384xf32, #tpu.memory_space<vmem>>, vector<16x384xf32>
      tpu.vector_store %arg8[%c0_11, %c0_12], %12 {strides = array<i32>} : memref<16x384xf32, #tpu.memory_space<vmem>>, vector<16x384xf32>,
    } else {
    }
    %c0 = arith.constant 0 : index
    %c0_1 = arith.constant 0 : index
    %3 = vector.load %arg8[%c0, %c0_1] : memref<16x384xf32, #tpu.memory_space<vmem>>, vector<16x384xf32>
    %c0_2 = arith.constant 0 : index
    %c0_3 = arith.constant 0 : index
    %4 = vector.load %arg2[%c0_2, %c0_3] : memref<16x16xf32, #tpu.memory_space<vmem>>, vector<16x16xf32>
    %c0_4 = arith.constant 0 : index
    %c0_5 = arith.constant 0 : index
    %5 = vector.load %arg3[%c0_4, %c0_5] : memref<16x384xf32, #tpu.memory_space<vmem>>, vector<16x384xf32>
    %cst = arith.constant dense<0.000000e+00> : vector<16x384xf32>
    %6 = tpu.matmul %4, %5, %cst {dimension_numbers = #tpu.dot_dimension_numbers<[1], [0], [0], [1], [0, 0, 1, 1], [], []>} : vector<16x16xf32>, vector<16x384xf32>, vector<16x384xf32> -> vector<16x384xf32>
    %7 = arith.addf %3, %6 : vector<16x384xf32>
    %c0_6 = arith.constant 0 : index
    %c0_7 = arith.constant 0 : index
    %8 = vector.load %arg8[%c0_6, %c0_7] : memref<16x384xf32, #tpu.memory_space<vmem>>, vector<16x384xf32>
    tpu.vector_store %arg8[%c0_6, %c0_7], %7 {strides = array<i32>} : memref<16x384xf32, #tpu.memory_space<vmem>>, vector<16x384xf32>,
    %c0_i32_8 = arith.constant 0 : i32
    %9 = arith.cmpi eq, %arg1, %c0_i32_8 : i32
    %10 = arith.extui %9 : i1 to i32
    %c0_i32_9 = arith.constant 0 : i32
    %11 = arith.cmpi ne, %10, %c0_i32_9 : i32
    scf.if %11 {
      %c0_10 = arith.constant 0 : index
      %c0_11 = arith.constant 0 : index
      %12 = vector.load %arg6[%c0_10, %c0_11] : memref<3x384xf32, #tpu.memory_space<vmem>>, vector<1x384xf32>
      %c1 = arith.constant 1 : index
      %c0_12 = arith.constant 0 : index
      %13 = vector.load %arg6[%c1, %c0_12] : memref<3x384xf32, #tpu.memory_space<vmem>>, vector<1x128xf32>
      %c2 = arith.constant 2 : index
      %c0_13 = arith.constant 0 : index
      %14 = vector.load %arg6[%c2, %c0_13] : memref<3x384xf32, #tpu.memory_space<vmem>>, vector<1x128xf32>
      %c0_14 = arith.constant 0 : index
      %c0_15 = arith.constant 0 : index
      %15 = vector.load %arg8[%c0_14, %c0_15] : memref<16x384xf32, #tpu.memory_space<vmem>>, vector<16x384xf32>
      %16 = vector.broadcast %12 : vector<1x384xf32> to vector<16x384xf32>
      %17 = arith.addf %15, %16 : vector<16x384xf32>
      %cst_16 = arith.constant 0.000000e+00 : f32
      %18 = vector.broadcast %cst_16 : f32 to vector<16x384xf32>
      %19 = arith.maximumf %17, %18 : vector<16x384xf32>
      %c0_17 = arith.constant 0 : index
      %c0_18 = arith.constant 0 : index
      %20 = vector.load %arg4[%c0_17, %c0_18] : memref<384x128xf32, #tpu.memory_space<vmem>>, vector<384x128xf32>
      %cst_19 = arith.constant dense<0.000000e+00> : vector<16x128xf32>
      %21 = tpu.matmul %19, %20, %cst_19 {dimension_numbers = #tpu.dot_dimension_numbers<[1], [0], [0], [1], [0, 0, 1, 1], [], []>} : vector<16x384xf32>, vector<384x128xf32>, vector<16x128xf32> -> vector<16x128xf32>
      %22 = vector.broadcast %13 : vector<1x128xf32> to vector<16x128xf32>
      %23 = arith.addf %21, %22 : vector<16x128xf32>
      %cst_20 = arith.constant 0.000000e+00 : f32
      %24 = vector.broadcast %cst_20 : f32 to vector<16x128xf32>
      %25 = arith.maximumf %23, %24 : vector<16x128xf32>
      %c0_21 = arith.constant 0 : index
      %c0_22 = arith.constant 0 : index
      %26 = vector.load %arg5[%c0_21, %c0_22] : memref<128x128xf32, #tpu.memory_space<vmem>>, vector<128x128xf32>
      %cst_23 = arith.constant dense<0.000000e+00> : vector<16x128xf32>
      %27 = tpu.matmul %25, %26, %cst_23 {dimension_numbers = #tpu.dot_dimension_numbers<[1], [0], [0], [1], [0, 0, 1, 1], [], []>} : vector<16x128xf32>, vector<128x128xf32>, vector<16x128xf32> -> vector<16x128xf32>
      %28 = vector.broadcast %14 : vector<1x128xf32> to vector<16x128xf32>
      %29 = arith.addf %27, %28 : vector<16x128xf32>
      %c0_24 = arith.constant 0 : index
      %c0_25 = arith.constant 0 : index
      %30 = vector.load %arg7[%c0_24, %c0_25] : memref<16x128xf32, #tpu.memory_space<vmem>>, vector<16x128xf32>
      tpu.vector_store %arg7[%c0_24, %c0_25], %29 {strides = array<i32>} : memref<16x128xf32, #tpu.memory_space<vmem>>, vector<16x128xf32>,
    } else {
    }
    return
  }
  func.func @transform_0(%arg0: i32, %arg1: i32) -> (i32, i32) {
    %c0_i32 = arith.constant 0 : i32
    return %arg0, %arg1 : i32, i32
  }
  func.func @transform_1(%arg0: i32, %arg1: i32) -> (i32, i32) {
    %c0_i32 = arith.constant 0 : i32
    %c0_i32_0 = arith.constant 0 : i32
    return %arg1, %c0_i32 : i32, i32
  }
  func.func @transform_2(%arg0: i32, %arg1: i32) -> (i32, i32) {
    %c0_i32 = arith.constant 0 : i32
    %c0_i32_0 = arith.constant 0 : i32
    %c0_i32_1 = arith.constant 0 : i32
    return %c0_i32, %c0_i32_0 : i32, i32
  }
  func.func @transform_3(%arg0: i32, %arg1: i32) -> (i32, i32) {
    %c0_i32 = arith.constant 0 : i32
    %c0_i32_0 = arith.constant 0 : i32
    %c0_i32_1 = arith.constant 0 : i32
    return %c0_i32, %c0_i32_0 : i32, i32
  }
  func.func @transform_4(%arg0: i32, %arg1: i32) -> (i32, i32) {
    %c0_i32 = arith.constant 0 : i32
    %c0_i32_0 = arith.constant 0 : i32
    %c0_i32_1 = arith.constant 0 : i32
    return %c0_i32, %c0_i32_0 : i32, i32
  }
  func.func @transform_5(%arg0: i32, %arg1: i32) -> (i32, i32) {
    %c0_i32 = arith.constant 0 : i32
    %c0_i32_0 = arith.constant 0 : i32
    return %arg0, %c0_i32 : i32, i32
  }
}

</mosaic_0001>

<llo_original>
// kernel: tpu_custom_call.1
$region0: #{tpu_custom_call.1}
  #allocation0 [shape = 'u32[]', space=smem, size = 0x4, offset = 0x4, fixed_abs, tag = 'smem constant byte address 0x4 - core index']
  #allocation1 [shape = 'u32[72,128]{1,0:T(1,128)}', space=vmem, size = 0x9000, scoped, tag = 'internal scratch']
  #allocation2 [shape = 'f32[16,384]{1,0:T(8,128)}', space=vmem, size = 0x6000, scoped, tag = 'scratch operand']
  %s0 = inlined_call_operand.hbm [shape: f32[16,16], index: 0, kind: input, shape index: {}]
  %s1 = inlined_call_operand.hbm [shape: f32[16,384], index: 1, kind: input, shape index: {}]
  %s2 = inlined_call_operand.hbm [shape: f32[384,128], index: 2, kind: input, shape index: {}]
  %s3 = inlined_call_operand.hbm [shape: f32[128,128], index: 3, kind: input, shape index: {}]
  %s4 = inlined_call_operand.hbm [shape: f32[3,384], index: 4, kind: input, shape index: {}]
  %s5 = inlined_call_operand.hbm [shape: f32[16,128], index: 5, kind: output, shape index: {}]
  %s6 = sld [smem:[#allocation0]]
  $region58: #{tpu_custom_call.1} parent=0
    _
  %s8 = ssub.s32 1, %s6
  %s9 = scalar_select 0, %s8, %s6
  $region1: #{tpu_custom_call.1} parent=0
    #allocation3 [shape = 'u8[8192]{0}', space=vmem, size = 0x2000, scoped, tag = 'input window, operand 0, single buffered']
    #allocation4 [shape = 's32[1]{0}', space=sflag, size = 0x4, scoped, tag = 'scoped memory for tpu_custom_call.1']
    #allocation5 [shape = 's32[1]{0}', space=sflag, size = 0x4, scoped, tag = 'scoped memory for tpu_custom_call.1']
    #allocation6 [shape = 'u8[24576]{0}', space=vmem, size = 0x6000, scoped, tag = 'input window, operand 1, single buffered']
    #allocation7 [shape = 's32[1]{0}', space=sflag, size = 0x4, scoped, tag = 'scoped memory for tpu_custom_call.1']
    #allocation8 [shape = 'u8[196608]{0}', space=vmem, size = 0x30000, scoped, tag = 'input window, operand 2, single buffered']
    #allocation9 [shape = 'u8[65536]{0}', space=vmem, size = 0x10000, scoped, tag = 'input window, operand 3, single buffered']
    #allocation10 [shape = 's32[1]{0}', space=sflag, size = 0x4, scoped, tag = 'scoped memory for tpu_custom_call.1']
    #allocation11 [shape = 'u8[6144]{0}', space=vmem, size = 0x1800, scoped, tag = 'input window, operand 4, single buffered']
    #allocation12 [shape = 'u8[8192]{0}', space=vmem, size = 0x2000, scoped, tag = 'output window, operand 0, single buffered']
    %10 = vsyncpa [#allocation4], 0
    %11 = vsyncpa [#allocation7], 0
    %12 = vsyncpa [#allocation10], 0
    %13 = vsyncpa [#allocation5], 0
    // Predicated region
    $region2: #{tpu_custom_call.1} parent=1 // pred_check
      _
    $region3: #{tpu_custom_call.1} parent=1 // pred_check_branch
      %15 = sbr.rel (0) target = $region5
    $region4: #{tpu_custom_call.1} parent=1 // pred_region
      %17 = vsyncadd [#allocation4], 0
      %s18 = sshll.u32 %s0, 4
      %s19 = int_to_ptr.hbm [resolvable:$true] %s18
      %s20 = sshll.u32 [#allocation3], 4
      %s21 = int_to_ptr.vmem [resolvable:$true] %s20
      %26 = dma.hbm_to_vmem [thread:$0]  %s19, 256, %s21, [#allocation4], 128, 128, 8
    $region5: #{tpu_custom_call.1} parent=1 // pred_fallthru
      _
    // Predicated region
    $region6: #{tpu_custom_call.1} parent=1 // pred_check
      _
    $region7: #{tpu_custom_call.1} parent=1 // pred_check_branch
      %28 = sbr.rel (0) target = $region9
    $region8: #{tpu_custom_call.1} parent=1 // pred_region
      %30 = vsyncadd [#allocation7], 0
      %s31 = sshll.u32 %s1, 4
      %s32 = int_to_ptr.hbm [resolvable:$true] %s31
      %s33 = sshll.u32 [#allocation6], 4
      %s34 = int_to_ptr.vmem [resolvable:$true] %s33
      %39 = dma.hbm_to_vmem [thread:$0]  %s32, 768, %s34, [#allocation7], 384, 384, 24
    $region9: #{tpu_custom_call.1} parent=1 // pred_fallthru
      _
    // Predicated region
    $region10: #{tpu_custom_call.1} parent=1 // pred_check
      _
    $region11: #{tpu_custom_call.1} parent=1 // pred_check_branch
      %41 = sbr.rel (0) target = $region13
    $region12: #{tpu_custom_call.1} parent=1 // pred_region
      %43 = vsyncadd [#allocation7], 0
      %s44 = sshll.u32 %s2, 4
      %s45 = int_to_ptr.hbm [resolvable:$true] %s44
      %s46 = sshll.u32 [#allocation8], 4
      %s47 = int_to_ptr.vmem [resolvable:$true] %s46
      %52 = dma.hbm_to_vmem [thread:$0]  %s45, 6144, %s47, [#allocation7], 128, 128, 8
    $region13: #{tpu_custom_call.1} parent=1 // pred_fallthru
      _
    // Predicated region
    $region14: #{tpu_custom_call.1} parent=1 // pred_check
      _
    $region15: #{tpu_custom_call.1} parent=1 // pred_check_branch
      %54 = sbr.rel (0) target = $region17
    $region16: #{tpu_custom_call.1} parent=1 // pred_region
      %56 = vsyncadd [#allocation10], 0
      %s57 = sshll.u32 %s3, 4
      %s58 = int_to_ptr.hbm [resolvable:$true] %s57
      %s59 = sshll.u32 [#allocation9], 4
      %s60 = int_to_ptr.vmem [resolvable:$true] %s59
      %65 = dma.hbm_to_vmem [thread:$0]  %s58, 2048, %s60, [#allocation10], 128, 128, 8
    $region17: #{tpu_custom_call.1} parent=1 // pred_fallthru
      _
    // Predicated region
    $region18: #{tpu_custom_call.1} parent=1 // pred_check
      _
    $region19: #{tpu_custom_call.1} parent=1 // pred_check_branch
      %67 = sbr.rel (0) target = $region21
    $region20: #{tpu_custom_call.1} parent=1 // pred_region
      %69 = vsyncadd [#allocation10], 0
      %s71 = sshll.u32 %s4, 4
      %s72 = int_to_ptr.hbm [resolvable:$true] %s71
      %s73 = sshll.u32 [#allocation11], 4
      %s74 = int_to_ptr.vmem [resolvable:$true] %s73
      %76 = dma.hbm_to_vmem [thread:$0]  %s72, 192, %s74, [#allocation10]
    $region21: #{tpu_custom_call.1} parent=1 // pred_fallthru
      _
    // Predicated region
    $region22: #{tpu_custom_call.1} parent=1 // pred_check
      _
    $region23: #{tpu_custom_call.1} parent=1 // pred_check_branch
      %78 = sbr.rel (0) target = $region25
    $region24: #{tpu_custom_call.1} parent=1 // pred_region
      %80 = dma.done [#allocation4], 256
    $region25: #{tpu_custom_call.1} parent=1 // pred_fallthru
      _
    // Predicated region
    $region26: #{tpu_custom_call.1} parent=1 // pred_check
      _
    $region27: #{tpu_custom_call.1} parent=1 // pred_check_branch
      %82 = sbr.rel (0) target = $region29
    $region28: #{tpu_custom_call.1} parent=1 // pred_region
      %84 = dma.done [#allocation7], 768
    $region29: #{tpu_custom_call.1} parent=1 // pred_fallthru
      _
    // Predicated region
    $region30: #{tpu_custom_call.1} parent=1 // pred_check
      _
    $region31: #{tpu_custom_call.1} parent=1 // pred_check_branch
      %86 = sbr.rel (0) target = $region33
    $region32: #{tpu_custom_call.1} parent=1 // pred_region
      %88 = dma.done [#allocation7], 6144
    $region33: #{tpu_custom_call.1} parent=1 // pred_fallthru
      _
    // Predicated region
    $region34: #{tpu_custom_call.1} parent=1 // pred_check
      _
    $region35: #{tpu_custom_call.1} parent=1 // pred_check_branch
      %90 = sbr.rel (0) target = $region37
    $region36: #{tpu_custom_call.1} parent=1 // pred_region
      %92 = dma.done [#allocation10], 2048
    $region37: #{tpu_custom_call.1} parent=1 // pred_fallthru
      _
    // Predicated region
    $region38: #{tpu_custom_call.1} parent=1 // pred_check
      _
    $region39: #{tpu_custom_call.1} parent=1 // pred_check_branch
      %94 = sbr.rel (0) target = $region41
    $region40: #{tpu_custom_call.1} parent=1 // pred_region
      %96 = dma.done [#allocation10], 192
    $region41: #{tpu_custom_call.1} parent=1 // pred_fallthru
      _
    %p97 = scmp.eq.s32.totalorder 0, 0
    // Predicated region
    $region42: #{tpu_custom_call.1} parent=1 // pred_check
      %p98 = pneg %p97
    $region43: #{tpu_custom_call.1} parent=1 // pred_check_branch
      %100 = sbr.rel (%p98) target = $region45
    $region44: #{tpu_custom_call.1} parent=1 // pred_region
      %101 = vst [vmem:[#allocation2] sm:$0xff] 0.0
      %102 = vst [vmem:[#allocation2 + $0x8] sm:$0xff] 0.0
      %103 = vst [vmem:[#allocation2 + $0x10] sm:$0xff] 0.0
      %104 = vst [vmem:[#allocation2 + $0x18] sm:$0xff] 0.0
      %105 = vst [vmem:[#allocation2 + $0x20] sm:$0xff] 0.0
      %106 = vst [vmem:[#allocation2 + $0x28] sm:$0xff] 0.0
    $region45: #{tpu_custom_call.1} parent=1 // pred_fallthru
      _
    %v107 = vld [vmem:[#allocation2] sm:$0xff]
    %v108 = vld [vmem:[#allocation2 + $0x8] sm:$0xff]
    %v109 = vld [vmem:[#allocation2 + $0x10] sm:$0xff]
    %v110 = vld [vmem:[#allocation2 + $0x18] sm:$0xff]
    %v111 = vld [vmem:[#allocation2 + $0x20] sm:$0xff]
    %v112 = vld [vmem:[#allocation2 + $0x28] sm:$0xff]
    %v113 = vld [vmem:[#allocation3] sm:$0xff]
    %v114 = vld [vmem:[#allocation3 + $0x8] sm:$0xff]
    %v115 = vld [vmem:[#allocation6] sm:$0xff]
    %v116 = vld [vmem:[#allocation6 + $0x8] sm:$0xff]
    %v117 = vld [vmem:[#allocation6 + $0x10] sm:$0xff]
    %v118 = vld [vmem:[#allocation6 + $0x18] sm:$0xff]
    %v119 = vld [vmem:[#allocation6 + $0x20] sm:$0xff]
    %v120 = vld [vmem:[#allocation6 + $0x28] sm:$0xff]
    %vm121 = vcmask 130048
    %v123 = vsel %vm121, %v113, 0
    %v126 = vsel %vm121, %v114, 0
    %128 = vmatpush.msra.mxu0 0.0
    %129 = vmatpush.msra.mxu0 0.0
    %130 = vmatpush.msra.mxu0 0.0
    %131 = vmatpush.msra.mxu0 0.0
    %132 = vmatpush.msra.mxu0 0.0
    %133 = vmatpush.msra.mxu0 0.0
    %134 = vmatpush.msra.mxu0 0.0
    %135 = vmatpush.msra.mxu0 0.0
    %136 = vmatpush.msra.mxu0 0.0
    %137 = vmatpush.msra.mxu0 0.0
    %138 = vmatpush.msra.mxu0 0.0
    %139 = vmatpush.msra.mxu0 0.0
    %140 = vmatpush.msra.mxu0 0.0
    %141 = vmatpush.msra.mxu0 0.0
    %142 = vmatpush.msra.mxu0 %v118
    %143 = vmatpush.msra.mxu0 %v115
    %144 = vmatmul.f32.gmra.mxu0 %v123
    %v145 = vpop.f32.mrf.mxu0
    %v146 = vadd.f32 0.0, %v145
    %147 = vmatmul.f32.gmra.mxu0 %v126
    %v148 = vpop.f32.mrf.mxu0
    %v149 = vadd.f32 0.0, %v148
    %150 = vdwg.mxu0
    %151 = vmatpush.msra.mxu0 0.0
    %152 = vmatpush.msra.mxu0 0.0
    %153 = vmatpush.msra.mxu0 0.0
    %154 = vmatpush.msra.mxu0 0.0
    %155 = vmatpush.msra.mxu0 0.0
    %156 = vmatpush.msra.mxu0 0.0
    %157 = vmatpush.msra.mxu0 0.0
    %158 = vmatpush.msra.mxu0 0.0
    %159 = vmatpush.msra.mxu0 0.0
    %160 = vmatpush.msra.mxu0 0.0
    %161 = vmatpush.msra.mxu0 0.0
    %162 = vmatpush.msra.mxu0 0.0
    %163 = vmatpush.msra.mxu0 0.0
    %164 = vmatpush.msra.mxu0 0.0
    %165 = vmatpush.msra.mxu0 %v119
    %166 = vmatpush.msra.mxu0 %v116
    %167 = vmatmul.f32.gmra.mxu0 %v123
    %v168 = vpop.f32.mrf.mxu0
    %v169 = vadd.f32 0.0, %v168
    %170 = vmatmul.f32.gmra.mxu0 %v126
    %v171 = vpop.f32.mrf.mxu0
    %v172 = vadd.f32 0.0, %v171
    %173 = vdwg.mxu0
    %174 = vmatpush.msra.mxu0 0.0
    %175 = vmatpush.msra.mxu0 0.0
    %176 = vmatpush.msra.mxu0 0.0
    %177 = vmatpush.msra.mxu0 0.0
    %178 = vmatpush.msra.mxu0 0.0
    %179 = vmatpush.msra.mxu0 0.0
    %180 = vmatpush.msra.mxu0 0.0
    %181 = vmatpush.msra.mxu0 0.0
    %182 = vmatpush.msra.mxu0 0.0
    %183 = vmatpush.msra.mxu0 0.0
    %184 = vmatpush.msra.mxu0 0.0
    %185 = vmatpush.msra.mxu0 0.0
    %186 = vmatpush.msra.mxu0 0.0
    %187 = vmatpush.msra.mxu0 0.0
    %188 = vmatpush.msra.mxu0 %v120
    %189 = vmatpush.msra.mxu0 %v117
    %190 = vmatmul.f32.gmra.mxu0 %v123
    %v191 = vpop.f32.mrf.mxu0
    %v192 = vadd.f32 0.0, %v191
    %193 = vmatmul.f32.gmra.mxu0 %v126
    %v194 = vpop.f32.mrf.mxu0
    %v195 = vadd.f32 0.0, %v194
    %196 = vdwg.mxu0
    %v197 = vadd.f32 %v107, %v146
    %v198 = vadd.f32 %v108, %v169
    %v199 = vadd.f32 %v109, %v192
    %v200 = vadd.f32 %v110, %v149
    %v201 = vadd.f32 %v111, %v172
    %v202 = vadd.f32 %v112, %v195
    %203 = vst [vmem:[#allocation2] sm:$0xff] %v197
    %204 = vst [vmem:[#allocation2 + $0x8] sm:$0xff] %v198
    %205 = vst [vmem:[#allocation2 + $0x10] sm:$0xff] %v199
    %206 = vst [vmem:[#allocation2 + $0x18] sm:$0xff] %v200
    %207 = vst [vmem:[#allocation2 + $0x20] sm:$0xff] %v201
    %208 = vst [vmem:[#allocation2 + $0x28] sm:$0xff] %v202
    // Predicated region
    $region46: #{tpu_custom_call.1} parent=1 // pred_check
      %p209 = pneg %p97
    $region47: #{tpu_custom_call.1} parent=1 // pred_check_branch
      %211 = sbr.rel (%p209) target = $region49
    $region48: #{tpu_custom_call.1} parent=1 // pred_region
      %v212 = vld [vmem:[#allocation11] ss:$4 sm:$0x7]
      %v213 = vld [vmem:[#allocation11 + $0x1] sm:$0x1]
      %v214 = vld [vmem:[#allocation11 + $0x2] sm:$0x1]
      %v215 = vld [vmem:[#allocation2] sm:$0xff]
      %v216 = vld [vmem:[#allocation2 + $0x8] sm:$0xff]
      %v217 = vld [vmem:[#allocation2 + $0x10] sm:$0xff]
      %v218 = vld [vmem:[#allocation2 + $0x18] sm:$0xff]
      %v219 = vld [vmem:[#allocation2 + $0x20] sm:$0xff]
      %v220 = vld [vmem:[#allocation2 + $0x28] sm:$0xff]
      %v222 = vperm.slane %v212, 0
      %v223 = vperm.slane %v212, 1
      %v224 = vperm.slane %v212, 2
      %v228 = vadd.f32 %v215, %v222
      %v229 = vadd.f32 %v216, %v223
      %v230 = vadd.f32 %v217, %v224
      %v231 = vadd.f32 %v218, %v222
      %v232 = vadd.f32 %v219, %v223
      %v233 = vadd.f32 %v220, %v224
      %v234 = vmax.f32 %v228, 0.0
      %v235 = vmax.f32 %v229, 0.0
      %v236 = vmax.f32 %v230, 0.0
      %v237 = vmax.f32 %v231, 0.0
      %v238 = vmax.f32 %v232, 0.0
      %v239 = vmax.f32 %v233, 0.0
      %v240 = vld [vmem:[#allocation8] sm:$0xff]
      %v241 = vld [vmem:[#allocation8 + $0x8] sm:$0xff]
      %v242 = vld [vmem:[#allocation8 + $0x10] sm:$0xff]
      %v243 = vld [vmem:[#allocation8 + $0x18] sm:$0xff]
      %v244 = vld [vmem:[#allocation8 + $0x20] sm:$0xff]
      %v245 = vld [vmem:[#allocation8 + $0x28] sm:$0xff]
      %v246 = vld [vmem:[#allocation8 + $0x30] sm:$0xff]
      %v247 = vld [vmem:[#allocation8 + $0x38] sm:$0xff]
      %v248 = vld [vmem:[#allocation8 + $0x40] sm:$0xff]
      %v249 = vld [vmem:[#allocation8 + $0x48] sm:$0xff]
      %v250 = vld [vmem:[#allocation8 + $0x50] sm:$0xff]
      %v251 = vld [vmem:[#allocation8 + $0x58] sm:$0xff]
      %v252 = vld [vmem:[#allocation8 + $0x60] sm:$0xff]
      %v253 = vld [vmem:[#allocation8 + $0x68] sm:$0xff]
      %v254 = vld [vmem:[#allocation8 + $0x70] sm:$0xff]
      %v255 = vld [vmem:[#allocation8 + $0x78] sm:$0xff]
      %v256 = vld [vmem:[#allocation8 + $0x80] sm:$0xff]
      %v257 = vld [vmem:[#allocation8 + $0x88] sm:$0xff]
      %v258 = vld [vmem:[#allocation8 + $0x90] sm:$0xff]
      %v259 = vld [vmem:[#allocation8 + $0x98] sm:$0xff]
      %v260 = vld [vmem:[#allocation8 + $0xa0] sm:$0xff]
      %v261 = vld [vmem:[#allocation8 + $0xa8] sm:$0xff]
      %v262 = vld [vmem:[#allocation8 + $0xb0] sm:$0xff]
      %v263 = vld [vmem:[#allocation8 + $0xb8] sm:$0xff]
      %v264 = vld [vmem:[#allocation8 + $0xc0] sm:$0xff]
      %v265 = vld [vmem:[#allocation8 + $0xc8] sm:$0xff]
      %v266 = vld [vmem:[#allocation8 + $0xd0] sm:$0xff]
      %v267 = vld [vmem:[#allocation8 + $0xd8] sm:$0xff]
      %v268 = vld [vmem:[#allocation8 + $0xe0] sm:$0xff]
      %v269 = vld [vmem:[#allocation8 + $0xe8] sm:$0xff]
      %v270 = vld [vmem:[#allocation8 + $0xf0] sm:$0xff]
      %v271 = vld [vmem:[#allocation8 + $0xf8] sm:$0xff]
      %v272 = vld [vmem:[#allocation8 + $0x100] sm:$0xff]
      %v273 = vld [vmem:[#allocation8 + $0x108] sm:$0xff]
      %v274 = vld [vmem:[#allocation8 + $0x110] sm:$0xff]
      %v275 = vld [vmem:[#allocation8 + $0x118] sm:$0xff]
      %v276 = vld [vmem:[#allocation8 + $0x120] sm:$0xff]
      %v277 = vld [vmem:[#allocation8 + $0x128] sm:$0xff]
      %v278 = vld [vmem:[#allocation8 + $0x130] sm:$0xff]
      %v279 = vld [vmem:[#allocation8 + $0x138] sm:$0xff]
      %v280 = vld [vmem:[#allocation8 + $0x140] sm:$0xff]
      %v281 = vld [vmem:[#allocation8 + $0x148] sm:$0xff]
      %v282 = vld [vmem:[#allocation8 + $0x150] sm:$0xff]
      %v283 = vld [vmem:[#allocation8 + $0x158] sm:$0xff]
      %v284 = vld [vmem:[#allocation8 + $0x160] sm:$0xff]
      %v285 = vld [vmem:[#allocation8 + $0x168] sm:$0xff]
      %v286 = vld [vmem:[#allocation8 + $0x170] sm:$0xff]
      %v287 = vld [vmem:[#allocation8 + $0x178] sm:$0xff]
      %v288 = vperm.slane %v213, 0
      %289 = vmatpush.msra.mxu0 %v255
      %290 = vmatpush.msra.mxu0 %v254
      %291 = vmatpush.msra.mxu0 %v253
      %292 = vmatpush.msra.mxu0 %v252
      %293 = vmatpush.msra.mxu0 %v251
      %294 = vmatpush.msra.mxu0 %v250
      %295 = vmatpush.msra.mxu0 %v249
      %296 = vmatpush.msra.mxu0 %v248
      %297 = vmatpush.msra.mxu0 %v247
      %298 = vmatpush.msra.mxu0 %v246
      %299 = vmatpush.msra.mxu0 %v245
      %300 = vmatpush.msra.mxu0 %v244
      %301 = vmatpush.msra.mxu0 %v243
      %302 = vmatpush.msra.mxu0 %v242
      %303 = vmatpush.msra.mxu0 %v241
      %304 = vmatpush.msra.mxu0 %v240
      %305 = vmatmul.f32.gmra.mxu0 %v234
      %v306 = vpop.f32.mrf.mxu0
      %v307 = vadd.f32 %v288, %v306
      %308 = vmatmul.f32.gmra.mxu0 %v237
      %v309 = vpop.f32.mrf.mxu0
      %v310 = vadd.f32 %v288, %v309
      %311 = vdwg.mxu0
      %312 = vmatpush.msra.mxu0 %v271
      %313 = vmatpush.msra.mxu0 %v270
      %314 = vmatpush.msra.mxu0 %v269
      %315 = vmatpush.msra.mxu0 %v268
      %316 = vmatpush.msra.mxu0 %v267
      %317 = vmatpush.msra.mxu0 %v266
      %318 = vmatpush.msra.mxu0 %v265
      %319 = vmatpush.msra.mxu0 %v264
      %320 = vmatpush.msra.mxu0 %v263
      %321 = vmatpush.msra.mxu0 %v262
      %322 = vmatpush.msra.mxu0 %v261
      %323 = vmatpush.msra.mxu0 %v260
      %324 = vmatpush.msra.mxu0 %v259
      %325 = vmatpush.msra.mxu0 %v258
      %326 = vmatpush.msra.mxu0 %v257
      %327 = vmatpush.msra.mxu0 %v256
      %328 = vmatmul.f32.gmra.mxu0 %v235
      %v329 = vpop.f32.mrf.mxu0
      %v330 = vadd.f32 %v307, %v329
      %331 = vmatmul.f32.gmra.mxu0 %v238
      %v332 = vpop.f32.mrf.mxu0
      %v333 = vadd.f32 %v310, %v332
      %334 = vdwg.mxu0
      %335 = vmatpush.msra.mxu0 %v287
      %336 = vmatpush.msra.mxu0 %v286
      %337 = vmatpush.msra.mxu0 %v285
      %338 = vmatpush.msra.mxu0 %v284
      %339 = vmatpush.msra.mxu0 %v283
      %340 = vmatpush.msra.mxu0 %v282
      %341 = vmatpush.msra.mxu0 %v281
      %342 = vmatpush.msra.mxu0 %v280
      %343 = vmatpush.msra.mxu0 %v279
      %344 = vmatpush.msra.mxu0 %v278
      %345 = vmatpush.msra.mxu0 %v277
      %346 = vmatpush.msra.mxu0 %v276
      %347 = vmatpush.msra.mxu0 %v275
      %348 = vmatpush.msra.mxu0 %v274
      %349 = vmatpush.msra.mxu0 %v273
      %350 = vmatpush.msra.mxu0 %v272
      %351 = vmatmul.f32.gmra.mxu0 %v236
      %v352 = vpop.f32.mrf.mxu0
      %v353 = vadd.f32 %v330, %v352
      %354 = vmatmul.f32.gmra.mxu0 %v239
      %v355 = vpop.f32.mrf.mxu0
      %v356 = vadd.f32 %v333, %v355
      %357 = vdwg.mxu0
      %v358 = vmax.f32 %v353, 0.0
      %v359 = vmax.f32 %v356, 0.0
      %v360 = vld [vmem:[#allocation9] sm:$0xff]
      %v361 = vld [vmem:[#allocation9 + $0x8] sm:$0xff]
      %v362 = vld [vmem:[#allocation9 + $0x10] sm:$0xff]
      %v363 = vld [vmem:[#allocation9 + $0x18] sm:$0xff]
      %v364 = vld [vmem:[#allocation9 + $0x20] sm:$0xff]
      %v365 = vld [vmem:[#allocation9 + $0x28] sm:$0xff]
      %v366 = vld [vmem:[#allocation9 + $0x30] sm:$0xff]
      %v367 = vld [vmem:[#allocation9 + $0x38] sm:$0xff]
      %v368 = vld [vmem:[#allocation9 + $0x40] sm:$0xff]
      %v369 = vld [vmem:[#allocation9 + $0x48] sm:$0xff]
      %v370 = vld [vmem:[#allocation9 + $0x50] sm:$0xff]
      %v371 = vld [vmem:[#allocation9 + $0x58] sm:$0xff]
      %v372 = vld [vmem:[#allocation9 + $0x60] sm:$0xff]
      %v373 = vld [vmem:[#allocation9 + $0x68] sm:$0xff]
      %v374 = vld [vmem:[#allocation9 + $0x70] sm:$0xff]
      %v375 = vld [vmem:[#allocation9 + $0x78] sm:$0xff]
      %v376 = vperm.slane %v214, 0
      %377 = vmatpush.msra.mxu0 %v375
      %378 = vmatpush.msra.mxu0 %v374
      %379 = vmatpush.msra.mxu0 %v373
      %380 = vmatpush.msra.mxu0 %v372
      %381 = vmatpush.msra.mxu0 %v371
      %382 = vmatpush.msra.mxu0 %v370
      %383 = vmatpush.msra.mxu0 %v369
      %384 = vmatpush.msra.mxu0 %v368
      %385 = vmatpush.msra.mxu0 %v367
      %386 = vmatpush.msra.mxu0 %v366
      %387 = vmatpush.msra.mxu0 %v365
      %388 = vmatpush.msra.mxu0 %v364
      %389 = vmatpush.msra.mxu0 %v363
      %390 = vmatpush.msra.mxu0 %v362
      %391 = vmatpush.msra.mxu0 %v361
      %392 = vmatpush.msra.mxu0 %v360
      %393 = vmatmul.f32.gmra.mxu0 %v358
      %v394 = vpop.f32.mrf.mxu0
      %v395 = vadd.f32 %v376, %v394
      %396 = vmatmul.f32.gmra.mxu0 %v359
      %v397 = vpop.f32.mrf.mxu0
      %v398 = vadd.f32 %v376, %v397
      %399 = vdwg.mxu0
      %400 = vst [vmem:[#allocation12] sm:$0xff] %v395
      %401 = vst [vmem:[#allocation12 + $0x8] sm:$0xff] %v398
    $region49: #{tpu_custom_call.1} parent=1 // pred_fallthru
      _
    // Predicated region
    $region50: #{tpu_custom_call.1} parent=1 // pred_check
      _
    $region51: #{tpu_custom_call.1} parent=1 // pred_check_branch
      %403 = sbr.rel (0) target = $region53
    $region52: #{tpu_custom_call.1} parent=1 // pred_region
      %405 = vsyncadd [#allocation5], 0
      %s406 = sshll.u32 [#allocation12], 4
      %s407 = int_to_ptr.vmem [resolvable:$true] %s406
      %s408 = sshll.u32 %s5, 4
      %s409 = int_to_ptr.hbm [resolvable:$true] %s408
      %414 = dma.vmem_to_hbm [thread:$0]  %s407, 256, %s409, [#allocation5], 128, 128, 8
    $region53: #{tpu_custom_call.1} parent=1 // pred_fallthru
      _
    // Predicated region
    $region54: #{tpu_custom_call.1} parent=1 // pred_check
      _
    $region55: #{tpu_custom_call.1} parent=1 // pred_check_branch
      %416 = sbr.rel (0) target = $region57
    $region56: #{tpu_custom_call.1} parent=1 // pred_region
      %418 = dma.done [#allocation5], 256
    $region57: #{tpu_custom_call.1} parent=1 // pred_fallthru
      _
    %419 = vsyncpa [#allocation4], 1
    %420 = vsyncpa [#allocation7], 1
    %421 = vsyncpa [#allocation10], 1
    %422 = vsyncpa [#allocation5], 1

</llo_original>
